<compile_context>
chip_gen: v6e
topology: v6e:2x2x1
jax: 0.10.0
libtpu: 0.0.40
codegen_flags: <defaults>
</compile_context>

<pallas_src>
import jax
import jax.numpy as jnp
from jax.experimental import pallas as pl
from jax.experimental.pallas import tpu as pltpu

IN_FEATURES = 8 * 8 * 7   # 448 (pads to 512 lanes in VMEM)
OUT_FEATURES = 1
# 4096 rows x 512 padded lanes x 4 B = 8 MiB / input buffer, 16 MiB double-buffered.
MAX_BATCH_TILE = 4096
VMEM_LIMIT_BYTES = 40 * 1024 * 1024   # headroom over ~20 MiB peak; legal on all gens


def linear_kernel(x_ref, w_ref, b_ref, o_ref):
    # x_ref: (TB, 448) VMEM   w_ref: (1, 448) VMEM
    # b_ref: (1,) SMEM scalar o_ref: (TB, 1) VMEM
    prod = x_ref[...] * w_ref[...]                      # VPU broadcast multiply
    y = jnp.sum(prod, axis=1, keepdims=True)            # XLU row reduce -> (TB, 1)
    o_ref[...] = (y + b_ref[0]).astype(o_ref.dtype)     # scalar bias from SMEM


def _round_up(x, m):
    return ((x + m - 1) // m) * m


def _choose_block_b(b):
    """Pick a batch tile: big enough to amortize per-step overhead, small enough
    for VMEM, and (when possible) leaving >= 2 grid steps for v7x megacore."""
    if b <= 8:
        # Full-extent block (legal even when not a multiple of 8).
        return b
    # Split the batch into at least two tiles (multiple of 8), capped by VMEM budget.
    half = _round_up(pl.cdiv(b, 2), 8)
    return min(MAX_BATCH_TILE, half)


def net5_forward(x, weight, bias):
    """x: (B, C, H, W) f32; weight: (1, 448) f32 (torch layout); bias: (1,) f32."""
    b = x.shape[0]
    x_flat = x.reshape(b, -1)                           # same row-major flatten as torch view
    assert x_flat.shape[1] == IN_FEATURES

    block_b = _choose_block_b(b)
    grid_b = pl.cdiv(b, block_b)

    out = pl.pallas_call(
        linear_kernel,
        out_shape=jax.ShapeDtypeStruct((b, OUT_FEATURES), jnp.float32),
        grid=(grid_b,),
        in_specs=[
            pl.BlockSpec((block_b, IN_FEATURES), lambda i: (i, 0)),   # batch tile (contiguous DMA)
            pl.BlockSpec((1, IN_FEATURES), lambda i: (0, 0)),          # weight row (resident)
            pl.BlockSpec(memory_space=pltpu.MemorySpace.SMEM),         # bias scalar
        ],
        out_specs=pl.BlockSpec((block_b, OUT_FEATURES), lambda i: (i, 0)),
        compiler_params=pltpu.CompilerParams(
            dimension_semantics=("parallel",),          # v7x megacore sharding of batch
            vmem_limit_bytes=VMEM_LIMIT_BYTES,          # explicit, portable across gens
        ),
        cost_estimate=pl.CostEstimate(
            flops=2 * b * IN_FEATURES,
            transcendentals=0,
            bytes_accessed=(b * IN_FEATURES + IN_FEATURES + b) * 4,
        ),
    )(x_flat, weight, bias)
    return out


if __name__ == "__main__":
    key = jax.random.PRNGKey(0)
    kx, kw, kb, kx2, kx3 = jax.random.split(key, 5)

    # Small input consistent with the flatten size: (B=2, C=7, H=8, W=8) -> 448 features
    x = jax.random.normal(kx, (2, 7, 8, 8), dtype=jnp.float32)

    # Deterministic PyTorch-style Linear init: U(-1/sqrt(fan_in), 1/sqrt(fan_in))
    bound = 1.0 / jnp.sqrt(jnp.float32(IN_FEATURES))
    weight = jax.random.uniform(kw, (OUT_FEATURES, IN_FEATURES),
                                minval=-bound, maxval=bound, dtype=jnp.float32)
    bias = jax.random.uniform(kb, (OUT_FEATURES,),
                              minval=-bound, maxval=bound, dtype=jnp.float32)

    # Primary small-shape test (single full-extent block path)
    y = net5_forward(x, weight, bias)
    jax.block_until_ready(y)
    y_ref = x.reshape(x.shape[0], -1) @ weight.T + bias
    assert y.shape == (2, 1)
    assert jnp.allclose(y, y_ref, atol=1e-5), "mismatch vs reference (B=2)"

    # Medium batch: exercises the >=2-grid-step split with a ragged last block
    x_med = jax.random.normal(kx2, (1050, 7, 8, 8), dtype=jnp.float32)
    y_med = net5_forward(x_med, weight, bias)
    jax.block_until_ready(y_med)
    y_med_ref = x_med.reshape(x_med.shape[0], -1) @ weight.T + bias
    assert y_med.shape == (1050, 1)
    assert jnp.allclose(y_med, y_med_ref, atol=1e-4), "mismatch vs reference (B=1050)"

    # Large batch: exercises the MAX_BATCH_TILE cap (4096-row tiles) + ragged tail
    x_big = jax.random.normal(kx3, (8200, 7, 8, 8), dtype=jnp.float32)
    y_big = net5_forward(x_big, weight, bias)
    jax.block_until_ready(y_big)
    y_big_ref = x_big.reshape(x_big.shape[0], -1) @ weight.T + bias
    assert y_big.shape == (8200, 1)
    assert jnp.allclose(y_big, y_big_ref, atol=1e-4), "mismatch vs reference (B=8200)"

    print("KERNEL_OK")
</pallas_src>

<mosaic_0001>
module attributes {stable_mosaic.version = 11 : i64} {
  func.func @linear_kernel(%arg0: i32, %arg1: memref<2x448xf32, #tpu.memory_space<vmem>>, %arg2: memref<1x448xf32, #tpu.memory_space<vmem>>, %arg3: memref<1xf32, #tpu.memory_space<smem>>, %arg4: memref<2x1xf32, #tpu.memory_space<vmem>>) attributes {dimension_semantics = [#tpu.dimension_semantics<parallel>], iteration_bounds = array<i64: 1>, scalar_prefetch = 0 : i64, scratch_operands = 0 : i64, tpu.core_type = #tpu.core_type<tc>, window_params = [{transform_indices = @transform_0, window_bounds = array<i64: 2, 448>}, {pipeline_mode = #tpu.pipeline_mode<synchronous>, transform_indices = @transform_1, window_bounds = array<i64: 1, 448>}, {transform_indices = @transform_2, window_bounds = array<i64: 1>}, {transform_indices = @transform_3, window_bounds = array<i64: 2, 1>}]} {
    %c0 = arith.constant 0 : index
    %c0_0 = arith.constant 0 : index
    %0 = vector.load %arg1[%c0, %c0_0] : memref<2x448xf32, #tpu.memory_space<vmem>>, vector<2x448xf32>
    %c0_1 = arith.constant 0 : index
    %c0_2 = arith.constant 0 : index
    %1 = vector.load %arg2[%c0_1, %c0_2] : memref<1x448xf32, #tpu.memory_space<vmem>>, vector<1x448xf32>
    %2 = vector.broadcast %1 : vector<1x448xf32> to vector<2x448xf32>
    %3 = arith.mulf %0, %2 : vector<2x448xf32>
    %cst = arith.constant dense<0.000000e+00> : vector<2xf32>
    %4 = vector.multi_reduction <add>, %3, %cst [1] : vector<2x448xf32> to vector<2xf32>
    %5 = vector.shape_cast %4 : vector<2xf32> to vector<2x1xf32>
    %c0_3 = arith.constant 0 : index
    %6 = memref.load %arg3[%c0_3] : memref<1xf32, #tpu.memory_space<smem>>
    %7 = vector.broadcast %6 : f32 to vector<2x1xf32>
    %8 = arith.addf %5, %7 : vector<2x1xf32>
    %c0_4 = arith.constant 0 : index
    %c0_5 = arith.constant 0 : index
    %9 = vector.load %arg4[%c0_4, %c0_5] : memref<2x1xf32, #tpu.memory_space<vmem>>, vector<2x1xf32>
    tpu.vector_store %arg4[%c0_4, %c0_5], %8 {strides = array<i32>} : memref<2x1xf32, #tpu.memory_space<vmem>>, vector<2x1xf32>,
    return
  }
  func.func @transform_0(%arg0: i32) -> (i32, i32) {
    %c0_i32 = arith.constant 0 : i32
    %c0_i32_0 = arith.constant 0 : i32
    return %arg0, %c0_i32 : i32, i32
  }
  func.func @transform_1(%arg0: i32) -> (i32, i32) {
    %c0_i32 = arith.constant 0 : i32
    %c0_i32_0 = arith.constant 0 : i32
    %c0_i32_1 = arith.constant 0 : i32
    return %c0_i32, %c0_i32_0 : i32, i32
  }
  func.func @transform_2(%arg0: i32) -> i32 {
    %c0_i32 = arith.constant 0 : i32
    %c0_i32_0 = arith.constant 0 : i32
    return %c0_i32 : i32
  }
  func.func @transform_3(%arg0: i32) -> (i32, i32) {
    %c0_i32 = arith.constant 0 : i32
    %c0_i32_0 = arith.constant 0 : i32
    return %arg0, %c0_i32 : i32, i32
  }
}

</mosaic_0001>

<llo_original>
// kernel: tpu_custom_call.1
$region0: #{tpu_custom_call.1}
  #allocation0 [shape = 'u32[]', space=smem, size = 0x4, offset = 0x4, fixed_abs, tag = 'smem constant byte address 0x4 - core index']
  #allocation1 [shape = 'u32[144,128]{1,0:T(1,128)}', space=vmem, size = 0x12000, scoped, tag = 'internal scratch']
  #allocation2 [shape = 'f32[1]{0:T(128)S(6)}', space=smem, size = 0x200, scoped, tag = 'scoped memory for tpu_custom_call.1']
  %s0 = inlined_call_operand.hbm [shape: f32[2,448], index: 0, kind: input, shape index: {}]
  %s1 = inlined_call_operand.hbm [shape: f32[1,448], index: 1, kind: input, shape index: {}]
  %s2 = inlined_call_operand.<no memory space> [shape: f32[1], index: 2, kind: input, shape index: {}]
  %s3 = inlined_call_operand.vmem [shape: f32[2,1], index: 3, kind: output, shape index: {}]
  %s4 = sld [smem:[#allocation0]]
  $region30: #{tpu_custom_call.1} parent=0
    _
  %s6 = ssub.s32 1, %s4
  %s7 = scalar_select 0, %s6, %s4
  %8 = sst [smem:[#allocation2]] %s2
  $region1: #{tpu_custom_call.1} parent=0
    #allocation3 [shape = 'u8[4096]{0}', space=vmem, size = 0x1000, scoped, tag = 'input window, operand 0, single buffered']
    #allocation4 [shape = 's32[1]{0}', space=sflag, size = 0x4, scoped, tag = 'scoped memory for tpu_custom_call.1']
    #allocation5 [shape = 'u8[2048]{0}', space=vmem, size = 0x800, scoped, tag = 'input window, operand 1, single buffered']
    #allocation6 [shape = 's32[1]{0}', space=sflag, size = 0x4, scoped, tag = 'scoped memory for tpu_custom_call.1']
    %9 = vsyncpa [#allocation4], 0
    %10 = vsyncpa [#allocation6], 0
    // Predicated region
    $region2: #{tpu_custom_call.1} parent=1 // pred_check
      _
    $region3: #{tpu_custom_call.1} parent=1 // pred_check_branch
      %12 = sbr.rel (0) target = $region5
    $region4: #{tpu_custom_call.1} parent=1 // pred_region
      %s14 = ssub.s32 128, 128
      %15 = vsyncadd [#allocation4], %s14
      %s17 = sshll.u32 [#allocation3], 4
      %s18 = int_to_ptr.vmem [resolvable:$true] %s17
      %20 = dma.hbm_to_vmem [thread:$0]  %s0, 128, %s18, [#allocation4]
    $region5: #{tpu_custom_call.1} parent=1 // pred_fallthru
      _
    // Predicated region
    $region6: #{tpu_custom_call.1} parent=1 // pred_check
      _
    $region7: #{tpu_custom_call.1} parent=1 // pred_check_branch
      %22 = sbr.rel (0) target = $region9
    $region8: #{tpu_custom_call.1} parent=1 // pred_region
      %s24 = ssub.s32 64, 64
      %25 = vsyncadd [#allocation6], %s24
      %s27 = sshll.u32 [#allocation5], 4
      %s28 = int_to_ptr.vmem [resolvable:$true] %s27
      %30 = dma.hbm_to_vmem [thread:$0]  %s1, 64, %s28, [#allocation6]
    $region9: #{tpu_custom_call.1} parent=1 // pred_fallthru
      _
    // Predicated region
    $region10: #{tpu_custom_call.1} parent=1 // pred_check
      _
    $region11: #{tpu_custom_call.1} parent=1 // pred_check_branch
      %32 = sbr.rel (0) target = $region13
    $region12: #{tpu_custom_call.1} parent=1 // pred_region
      _
    $region13: #{tpu_custom_call.1} parent=1 // pred_fallthru
      _
    // Predicated region
    $region14: #{tpu_custom_call.1} parent=1 // pred_check
      _
    $region15: #{tpu_custom_call.1} parent=1 // pred_check_branch
      %34 = sbr.rel (0) target = $region17
    $region16: #{tpu_custom_call.1} parent=1 // pred_region
      %35 = dma.done [#allocation4], 128
    $region17: #{tpu_custom_call.1} parent=1 // pred_fallthru
      _
    // Predicated region
    $region18: #{tpu_custom_call.1} parent=1 // pred_check
      _
    $region19: #{tpu_custom_call.1} parent=1 // pred_check_branch
      %37 = sbr.rel (0) target = $region21
    $region20: #{tpu_custom_call.1} parent=1 // pred_region
      %38 = dma.done [#allocation6], 64
    $region21: #{tpu_custom_call.1} parent=1 // pred_fallthru
      _
    %v39 = vld [vmem:[#allocation3] sm:$0xff]
    %v40 = vld [vmem:[#allocation5] sm:$0xf]
    %v42 = vlaneseq
    %v43 = vshrl.u32 %v42, 7
    %v44 = vsub.s32 0, %v43
    %v45 = vrot.slane %v40, %v44
    %v46 = vlaneseq
    %v47 = vshrl.u32 %v46, 7
    %v48 = vsub.s32 1, %v47
    %v49 = vrot.slane %v40, %v48
    %v50 = vlaneseq
    %v51 = vshrl.u32 %v50, 7
    %v52 = vsub.s32 2, %v51
    %v53 = vrot.slane %v40, %v52
    %v54 = vlaneseq
    %v55 = vshrl.u32 %v54, 7
    %v56 = vsub.s32 3, %v55
    %v57 = vrot.slane %v40, %v56
    %v58 = vcombine.low %v45, %v49
    %v59 = vcombine.low %v53, %v57
    %v61 = vunpack.c.l.s4 1983009808
    %v62 = vunpack.c.0.s8 %v61
    %v63 = vlaneseq
    %v64 = vshrl.u32 %v63, 7
    %v65 = vsub.s32 %v62, %v64
    %v66 = vrot.slane %v58, %v65
    %v68 = vunpack.c.l.s4 1983009808
    %v69 = vunpack.c.0.s8 %v68
    %v70 = vlaneseq
    %v71 = vshrl.u32 %v70, 7
    %v72 = vsub.s32 %v69, %v71
    %v73 = vrot.slane %v59, %v72
    %v74 = vcombine.low %v66, %v73
    %v76 = vmul.f32 %v39, %v74
    %v78 = vcombine.high %v76, %v76
    %v80 = vunpack.c.l.s4 1983009808
    %v81 = vunpack.c.0.s8 %v80
    %v82 = vlaneseq
    %v83 = vshrl.u32 %v82, 7
    %v84 = vsub.s32 %v81, %v83
    %v85 = vrot.slane %v76, %v84
    %v87 = vunpack.c.l.s4 1983009808
    %v88 = vunpack.c.0.s8 %v87
    %v89 = vlaneseq
    %v90 = vshrl.u32 %v89, 7
    %v91 = vsub.s32 %v88, %v90
    %v92 = vrot.slane %v78, %v91
    %v93 = vcombine.high %v85, %v85
    %v94 = vcombine.high %v92, %v92
    %vm99 = vcmask 1041408
    %v100 = vsel %vm99, %v85, 0.0
    %v101 = vsel %vm99, %v93, 0.0
    %v102 = vadd.f32 %v100, %v101
    %v103 = vsel %vm99, %v92, 0.0
    %v104 = vadd.f32 %v102, %v103
    %vm105 = vcmask 517120
    %v106 = vsel %vm105, %v94, 0.0
    %v107 = vadd.f32 %v104, %v106
    %108 = vadd.xlane.f32.xlu0 %v107
    %v109 = vpop.xlane.xlu0 %108
    %s110 = sld [smem:[#allocation2]]
    %v111 = vstv %s110
    %v112 = vadd.f32 %v109, %v111
    %vm113 = vcmask 1024
    %114 = vst.msk [vmem:[%s3] sm:$0x3] %vm113, %v112
    // Predicated region
    $region22: #{tpu_custom_call.1} parent=1 // pred_check
      _
    $region23: #{tpu_custom_call.1} parent=1 // pred_check_branch
      %116 = sbr.rel (0) target = $region25
    $region24: #{tpu_custom_call.1} parent=1 // pred_region
      _
    $region25: #{tpu_custom_call.1} parent=1 // pred_fallthru
      _
    // Predicated region
    $region26: #{tpu_custom_call.1} parent=1 // pred_check
      _
    $region27: #{tpu_custom_call.1} parent=1 // pred_check_branch
      %118 = sbr.rel (0) target = $region29
    $region28: #{tpu_custom_call.1} parent=1 // pred_region
      _
    $region29: #{tpu_custom_call.1} parent=1 // pred_fallthru
      _
    %119 = vsyncpa [#allocation4], 1
    %120 = vsyncpa [#allocation6], 1

</llo_original>
